<compile_context>
chip_gen: v7x
topology: tpu7x:2x2x1
jax: 0.10.0
libtpu: 0.0.40
codegen_flags: <defaults>
</compile_context>

<pallas_src>
import jax
import jax.numpy as jnp
from jax.experimental import pallas as pl
from jax.experimental.pallas import tpu as pltpu


def _round_up(n, m):
    return (n + m - 1) // m * m


def _block_diag(blocks):
    rows = sum(b.shape[0] for b in blocks)
    cols = sum(b.shape[1] for b in blocks)
    out = jnp.zeros((rows, cols), blocks[0].dtype)
    r = c = 0
    for b in blocks:
        out = out.at[r:r + b.shape[0], c:c + b.shape[1]].set(b)
        r += b.shape[0]
        c += b.shape[1]
    return out


def _pad_slab(a, rows, cols):
    return jnp.zeros((rows, cols), a.dtype).at[:a.shape[0], :a.shape[1]].set(a)


def _make_kernel(head_meta, core_meta, n_heads, head_dim, compute_dtype):
    """head_meta / core_meta: static tuples of (row_offset, k_rows) into the
    packed weight slab, in execution order."""

    def kernel(x_ref, hw_ref, w_ref, b_ref, out_ref):
        f32 = jnp.float32
        a = x_ref[...].astype(compute_dtype)                 # (TB, in_units)
        li = 0

        # --- fused head stage: concat / block-diagonal matmuls + ReLU ------
        for off, rows in head_meta:
            w = w_ref[off:off + rows, :].astype(compute_dtype)
            b = b_ref[li:li + 1, :]                          # (1, Nmax) f32
            z = jnp.dot(a, w, preferred_element_type=f32) + b
            a = jnp.maximum(z, 0.0).astype(compute_dtype)    # heads keep ReLU
            li += 1

        # --- head-weight mix: static lane-group slices, single add chain ---
        hw = hw_ref[...]                                     # (TB, n_heads)
        af = a.astype(f32)
        mixed = af[:, 0:head_dim] * hw[:, 0:1]
        for h in range(1, n_heads):
            mixed = mixed + af[:, h * head_dim:(h + 1) * head_dim] * hw[:, h:h + 1]
        a = mixed.astype(compute_dtype)                      # (TB, head_dim)

        # --- core stage: ReLU after every layer except the last ------------
        n_core = len(core_meta)
        for i, (off, rows) in enumerate(core_meta):
            w = w_ref[off:off + rows, :].astype(compute_dtype)
            b = b_ref[li:li + 1, :]
            z = jnp.dot(a, w, preferred_element_type=f32) + b
            li += 1
            if i < n_core - 1:
                a = jnp.maximum(z, 0.0).astype(compute_dtype)
            else:
                a = z                                        # last layer: no ReLU

        out_ref[...] = a.astype(out_ref.dtype)               # lane-dense store

    return kernel


def multi_head_mlp_forward(x, head_weight, head_params, core_params,
                           output_targets, *, compute_dtype=jnp.float32):
    """head_params: list (per head) of list of (W(in,out), b(out,)) tuples.
    core_params: list of (W(in,out), b(out,)) tuples.
    compute_dtype=jnp.bfloat16 uses MXU-native bf16 operands on v6e/v7x."""
    n_heads = len(head_params)
    n_head_layers = len(head_params[0])
    head_dim = head_params[0][-1][0].shape[1]     # H_last == hidden_units_core[0]
    B, in_units = x.shape

    # ---- fuse the per-head MLPs into concat / block-diagonal layers --------
    fused = []
    w0 = jnp.concatenate([hp[0][0] for hp in head_params], axis=1)
    b0 = jnp.concatenate([hp[0][1] for hp in head_params], axis=0)
    fused.append((w0, b0))
    for l in range(1, n_head_layers):
        wl = _block_diag([hp[l][0] for hp in head_params])
        bl = jnp.concatenate([hp[l][1] for hp in head_params], axis=0)
        fused.append((wl, bl))
    core = list(core_params)
    all_layers = fused + core

    # Common lane-padded output width (also pads the final layer to >=128).
    n_max = _round_up(max(w.shape[1] for w, _ in all_layers), 128)

    # Rows loaded per layer == width of the activation carried into that layer.
    k_rows = []
    for l, (w, _) in enumerate(fused):
        k_rows.append(w.shape[0] if l == 0 else n_max)
    for l, (w, _) in enumerate(core):
        k_rows.append(w.shape[0] if l == 0 else n_max)

    # ---- pack every weight / bias into two contiguous lane-dense slabs -----
    slabs, biases, meta = [], [], []
    off = 0
    for (w, b), rows in zip(all_layers, k_rows):
        slot = _round_up(rows, 8)                      # sublane-aligned start
        slabs.append(_pad_slab(w, slot, n_max))
        biases.append(_pad_slab(b.reshape(1, -1), 1, n_max))
        meta.append((off, rows))
        off += slot
    w_pack = jnp.concatenate(slabs, axis=0)            # (R_total, n_max)
    b_pack = jnp.concatenate(biases, axis=0)           # (L, n_max)

    head_meta = tuple(meta[:n_head_layers])
    core_meta = tuple(meta[n_head_layers:])

    # ---- batch grid: sublane-aligned tiles, parallel across TensorCores ----
    tb = min(512, _round_up(B, 8))
    b_pad = _round_up(B, tb)
    if b_pad != B:
        x = jnp.pad(x, ((0, b_pad - B), (0, 0)))
        head_weight = jnp.pad(head_weight, ((0, b_pad - B), (0, 0)))

    kernel = _make_kernel(head_meta, core_meta, n_heads, head_dim, compute_dtype)

    out = pl.pallas_call(
        kernel,
        out_shape=jax.ShapeDtypeStruct((b_pad, n_max), x.dtype),
        grid=(b_pad // tb,),
        in_specs=[
            pl.BlockSpec((tb, in_units), lambda i: (i, 0)),        # x tile
            pl.BlockSpec((tb, n_heads), lambda i: (i, 0)),         # head weights
            pl.BlockSpec(w_pack.shape, lambda i: (0, 0)),          # resident W slab
            pl.BlockSpec(b_pack.shape, lambda i: (0, 0)),          # resident b slab
        ],
        out_specs=pl.BlockSpec((tb, n_max), lambda i: (i, 0)),
        compiler_params=pltpu.CompilerParams(
            dimension_semantics=("parallel",)),
    )(x, head_weight, w_pack, b_pack)

    return out[:B, :output_targets]


def _init_linear(key, in_units, out_units):
    """Deterministic PyTorch-style uniform(-1/sqrt(in), 1/sqrt(in)) init."""
    kw, kb = jax.random.split(key)
    bound = 1.0 / (in_units ** 0.5)
    w = jax.random.uniform(kw, (in_units, out_units), jnp.float32, -bound, bound)
    b = jax.random.uniform(kb, (out_units,), jnp.float32, -bound, bound)
    return w, b


def _ref_forward(x, hw, head_params, core_params):
    """Plain-JAX reference mirroring the PyTorch module."""
    hs = []
    for head in head_params:
        a = x
        for w, b in head:
            a = jnp.maximum(a @ w + b, 0.0)
        hs.append(a)
    h_heads = jnp.stack(hs)                 # (n_heads, B, H)
    hw_t = hw.T[:, :, None]                 # (n_heads, B, 1)
    h = jnp.sum(h_heads * hw_t, axis=0)     # (B, H)
    a = h
    for i, (w, b) in enumerate(core_params):
        a = a @ w + b
        if i < len(core_params) - 1:
            a = jnp.maximum(a, 0.0)
    return a


if __name__ == "__main__":
    key = jax.random.PRNGKey(0)

    # Small shapes consistent with the module's constructor.
    B, in_units = 8, 16
    n_heads = 2
    hidden_units_heads = [32, 32]
    hidden_units_core = [32, 32]
    output_targets = 3
    assert hidden_units_heads[-1] == hidden_units_core[0]

    keys = iter(jax.random.split(key, 64))

    # Per-head MLP: units = [in_units] + hidden_units_heads, ReLU after every Linear.
    head_params = []
    for _ in range(n_heads):
        units = [in_units] + hidden_units_heads
        head_params.append(
            [_init_linear(next(keys), i, o) for i, o in zip(units, units[1:])])

    # Core MLP: units = [core0] + hidden_units_core + [output_targets],
    # ReLU after every Linear except the last.
    core_units = [hidden_units_core[0]] + hidden_units_core + [output_targets]
    core_params = [_init_linear(next(keys), i, o)
                   for i, o in zip(core_units, core_units[1:])]

    x = jax.random.normal(next(keys), (B, in_units), jnp.float32)
    head_weight = jax.random.uniform(next(keys), (B, n_heads), jnp.float32)

    out = multi_head_mlp_forward(x, head_weight, head_params, core_params,
                                 output_targets)
    out = jax.block_until_ready(out)

    ref = _ref_forward(x, head_weight, head_params, core_params)
    assert out.shape == (B, output_targets)
    assert jnp.allclose(out, ref, atol=1e-5, rtol=1e-5), "mismatch vs reference"

    print("KERNEL_OK")
</pallas_src>

<mosaic_0001>
module attributes {stable_mosaic.version = 11 : i64} {
  func.func @kernel(%arg0: i32, %arg1: memref<8x16xf32, #tpu.memory_space<vmem>>, %arg2: memref<8x2xf32, #tpu.memory_space<vmem>>, %arg3: memref<432x128xf32, #tpu.memory_space<vmem>>, %arg4: memref<5x128xf32, #tpu.memory_space<vmem>>, %arg5: memref<8x128xf32, #tpu.memory_space<vmem>>) attributes {dimension_semantics = [#tpu.dimension_semantics<parallel>], iteration_bounds = array<i64: 1>, scalar_prefetch = 0 : i64, scratch_operands = 0 : i64, tpu.core_type = #tpu.core_type<tc>, window_params = [{transform_indices = @transform_0, window_bounds = array<i64: 8, 16>}, {transform_indices = @transform_1, window_bounds = array<i64: 8, 2>}, {pipeline_mode = #tpu.pipeline_mode<synchronous>, transform_indices = @transform_2, window_bounds = array<i64: 432, 128>}, {pipeline_mode = #tpu.pipeline_mode<synchronous>, transform_indices = @transform_3, window_bounds = array<i64: 5, 128>}, {transform_indices = @transform_4, window_bounds = array<i64: 8, 128>}]} {
    %c0 = arith.constant 0 : index
    %c0_0 = arith.constant 0 : index
    %0 = vector.load %arg1[%c0, %c0_0] : memref<8x16xf32, #tpu.memory_space<vmem>>, vector<8x16xf32>
    %c0_1 = arith.constant 0 : index
    %c0_2 = arith.constant 0 : index
    %1 = vector.load %arg3[%c0_1, %c0_2] : memref<432x128xf32, #tpu.memory_space<vmem>>, vector<16x128xf32>
    %c0_3 = arith.constant 0 : index
    %c0_4 = arith.constant 0 : index
    %2 = vector.load %arg4[%c0_3, %c0_4] : memref<5x128xf32, #tpu.memory_space<vmem>>, vector<1x128xf32>
    %cst = arith.constant dense<0.000000e+00> : vector<8x128xf32>
    %3 = tpu.matmul %0, %1, %cst {dimension_numbers = #tpu.dot_dimension_numbers<[1], [0], [0], [1], [0, 0, 1, 1], [], []>} : vector<8x16xf32>, vector<16x128xf32>, vector<8x128xf32> -> vector<8x128xf32>
    %4 = vector.broadcast %2 : vector<1x128xf32> to vector<8x128xf32>
    %5 = arith.addf %3, %4 : vector<8x128xf32>
    %cst_5 = arith.constant 0.000000e+00 : f32
    %6 = vector.broadcast %cst_5 : f32 to vector<8x128xf32>
    %7 = arith.maximumf %5, %6 : vector<8x128xf32>
    %c16 = arith.constant 16 : index
    %c0_6 = arith.constant 0 : index
    %8 = vector.load %arg3[%c16, %c0_6] : memref<432x128xf32, #tpu.memory_space<vmem>>, vector<128x128xf32>
    %c1 = arith.constant 1 : index
    %c0_7 = arith.constant 0 : index
    %9 = vector.load %arg4[%c1, %c0_7] : memref<5x128xf32, #tpu.memory_space<vmem>>, vector<1x128xf32>
    %cst_8 = arith.constant dense<0.000000e+00> : vector<8x128xf32>
    %10 = tpu.matmul %7, %8, %cst_8 {dimension_numbers = #tpu.dot_dimension_numbers<[1], [0], [0], [1], [0, 0, 1, 1], [], []>} : vector<8x128xf32>, vector<128x128xf32>, vector<8x128xf32> -> vector<8x128xf32>
    %11 = vector.broadcast %9 : vector<1x128xf32> to vector<8x128xf32>
    %12 = arith.addf %10, %11 : vector<8x128xf32>
    %cst_9 = arith.constant 0.000000e+00 : f32
    %13 = vector.broadcast %cst_9 : f32 to vector<8x128xf32>
    %14 = arith.maximumf %12, %13 : vector<8x128xf32>
    %c0_10 = arith.constant 0 : index
    %c0_11 = arith.constant 0 : index
    %15 = vector.load %arg2[%c0_10, %c0_11] : memref<8x2xf32, #tpu.memory_space<vmem>>, vector<8x2xf32>
    %16 = vector.extract_strided_slice %14 {offsets = [0, 0], sizes = [8, 32], strides = [1, 1]} : vector<8x128xf32> to vector<8x32xf32>
    %17 = vector.extract_strided_slice %15 {offsets = [0, 0], sizes = [8, 1], strides = [1, 1]} : vector<8x2xf32> to vector<8x1xf32>
    %18 = vector.broadcast %17 : vector<8x1xf32> to vector<8x32xf32>
    %19 = arith.mulf %16, %18 : vector<8x32xf32>
    %20 = vector.extract_strided_slice %14 {offsets = [0, 32], sizes = [8, 32], strides = [1, 1]} : vector<8x128xf32> to vector<8x32xf32>
    %21 = vector.extract_strided_slice %15 {offsets = [0, 1], sizes = [8, 1], strides = [1, 1]} : vector<8x2xf32> to vector<8x1xf32>
    %22 = vector.broadcast %21 : vector<8x1xf32> to vector<8x32xf32>
    %23 = arith.mulf %20, %22 : vector<8x32xf32>
    %24 = arith.addf %19, %23 : vector<8x32xf32>
    %c144 = arith.constant 144 : index
    %c0_12 = arith.constant 0 : index
    %25 = vector.load %arg3[%c144, %c0_12] : memref<432x128xf32, #tpu.memory_space<vmem>>, vector<32x128xf32>
    %c2 = arith.constant 2 : index
    %c0_13 = arith.constant 0 : index
    %26 = vector.load %arg4[%c2, %c0_13] : memref<5x128xf32, #tpu.memory_space<vmem>>, vector<1x128xf32>
    %cst_14 = arith.constant dense<0.000000e+00> : vector<8x128xf32>
    %27 = tpu.matmul %24, %25, %cst_14 {dimension_numbers = #tpu.dot_dimension_numbers<[1], [0], [0], [1], [0, 0, 1, 1], [], []>} : vector<8x32xf32>, vector<32x128xf32>, vector<8x128xf32> -> vector<8x128xf32>
    %28 = vector.broadcast %26 : vector<1x128xf32> to vector<8x128xf32>
    %29 = arith.addf %27, %28 : vector<8x128xf32>
    %cst_15 = arith.constant 0.000000e+00 : f32
    %30 = vector.broadcast %cst_15 : f32 to vector<8x128xf32>
    %31 = arith.maximumf %29, %30 : vector<8x128xf32>
    %c176 = arith.constant 176 : index
    %c0_16 = arith.constant 0 : index
    %32 = vector.load %arg3[%c176, %c0_16] : memref<432x128xf32, #tpu.memory_space<vmem>>, vector<128x128xf32>
    %c3 = arith.constant 3 : index
    %c0_17 = arith.constant 0 : index
    %33 = vector.load %arg4[%c3, %c0_17] : memref<5x128xf32, #tpu.memory_space<vmem>>, vector<1x128xf32>
    %cst_18 = arith.constant dense<0.000000e+00> : vector<8x128xf32>
    %34 = tpu.matmul %31, %32, %cst_18 {dimension_numbers = #tpu.dot_dimension_numbers<[1], [0], [0], [1], [0, 0, 1, 1], [], []>} : vector<8x128xf32>, vector<128x128xf32>, vector<8x128xf32> -> vector<8x128xf32>
    %35 = vector.broadcast %33 : vector<1x128xf32> to vector<8x128xf32>
    %36 = arith.addf %34, %35 : vector<8x128xf32>
    %cst_19 = arith.constant 0.000000e+00 : f32
    %37 = vector.broadcast %cst_19 : f32 to vector<8x128xf32>
    %38 = arith.maximumf %36, %37 : vector<8x128xf32>
    %c304 = arith.constant 304 : index
    %c0_20 = arith.constant 0 : index
    %39 = vector.load %arg3[%c304, %c0_20] : memref<432x128xf32, #tpu.memory_space<vmem>>, vector<128x128xf32>
    %c4 = arith.constant 4 : index
    %c0_21 = arith.constant 0 : index
    %40 = vector.load %arg4[%c4, %c0_21] : memref<5x128xf32, #tpu.memory_space<vmem>>, vector<1x128xf32>
    %cst_22 = arith.constant dense<0.000000e+00> : vector<8x128xf32>
    %41 = tpu.matmul %38, %39, %cst_22 {dimension_numbers = #tpu.dot_dimension_numbers<[1], [0], [0], [1], [0, 0, 1, 1], [], []>} : vector<8x128xf32>, vector<128x128xf32>, vector<8x128xf32> -> vector<8x128xf32>
    %42 = vector.broadcast %40 : vector<1x128xf32> to vector<8x128xf32>
    %43 = arith.addf %41, %42 : vector<8x128xf32>
    %c0_23 = arith.constant 0 : index
    %c0_24 = arith.constant 0 : index
    %44 = vector.load %arg5[%c0_23, %c0_24] : memref<8x128xf32, #tpu.memory_space<vmem>>, vector<8x128xf32>
    tpu.vector_store %arg5[%c0_23, %c0_24], %43 {strides = array<i32>} : memref<8x128xf32, #tpu.memory_space<vmem>>, vector<8x128xf32>,
    return
  }
  func.func @transform_0(%arg0: i32) -> (i32, i32) {
    %c0_i32 = arith.constant 0 : i32
    %c0_i32_0 = arith.constant 0 : i32
    return %arg0, %c0_i32 : i32, i32
  }
  func.func @transform_1(%arg0: i32) -> (i32, i32) {
    %c0_i32 = arith.constant 0 : i32
    %c0_i32_0 = arith.constant 0 : i32
    return %arg0, %c0_i32 : i32, i32
  }
  func.func @transform_2(%arg0: i32) -> (i32, i32) {
    %c0_i32 = arith.constant 0 : i32
    %c0_i32_0 = arith.constant 0 : i32
    %c0_i32_1 = arith.constant 0 : i32
    return %c0_i32, %c0_i32_0 : i32, i32
  }
  func.func @transform_3(%arg0: i32) -> (i32, i32) {
    %c0_i32 = arith.constant 0 : i32
    %c0_i32_0 = arith.constant 0 : i32
    %c0_i32_1 = arith.constant 0 : i32
    return %c0_i32, %c0_i32_0 : i32, i32
  }
  func.func @transform_4(%arg0: i32) -> (i32, i32) {
    %c0_i32 = arith.constant 0 : i32
    %c0_i32_0 = arith.constant 0 : i32
    return %arg0, %c0_i32 : i32, i32
  }
}

</mosaic_0001>

<llo_original>
// kernel: tpu_custom_call.1
$region0: #{tpu_custom_call.1}
  #allocation0 [shape = 'u32[]', space=smem, size = 0x4, offset = 0x4, fixed_abs, tag = 'smem constant byte address 0x4 - core index']
  #allocation1 [shape = 'u32[144,128]{1,0:T(1,128)}', space=vmem, size = 0x12000, scoped, tag = 'internal scratch']
  %s0 = inlined_call_operand.vmem [shape: f32[8,16], index: 0, kind: input, shape index: {}]
  %s1 = inlined_call_operand.vmem [shape: f32[8,2], index: 1, kind: input, shape index: {}]
  %s2 = inlined_call_operand.hbm [shape: f32[432,128], index: 2, kind: input, shape index: {}]
  %s3 = inlined_call_operand.vmem [shape: f32[5,128], index: 3, kind: input, shape index: {}]
  %s4 = inlined_call_operand.hbm [shape: f32[8,128], index: 4, kind: output, shape index: {}]
  %s5 = sld [smem:[#allocation0]]
  $region30: #{tpu_custom_call.1} parent=0
    _
  %s7 = ssub.s32 1, %s5
  %s8 = scalar_select 0, %s7, %s5
  $region1: #{tpu_custom_call.1} parent=0
    #allocation2 [shape = 'u8[221184]{0}', space=vmem, size = 0x36000, scoped, tag = 'input window, operand 2, single buffered']
    #allocation3 [shape = 's32[1]{0}', space=sflag, size = 0x4, scoped, tag = 'scoped memory for tpu_custom_call.1']
    #allocation4 [shape = 's32[1]{0}', space=sflag, size = 0x4, scoped, tag = 'scoped memory for tpu_custom_call.1']
    #allocation5 [shape = 'u8[4096]{0}', space=vmem, size = 0x1000, scoped, tag = 'output window, operand 0, single buffered']
    %9 = vsyncpa [#allocation3], 0
    %10 = vsyncpa [#allocation4], 0
    // Predicated region
    $region2: #{tpu_custom_call.1} parent=1 // pred_check
      _
    $region3: #{tpu_custom_call.1} parent=1 // pred_check_branch
      %12 = sbr.rel (0) target = $region5
    $region4: #{tpu_custom_call.1} parent=1 // pred_region
      _
    $region5: #{tpu_custom_call.1} parent=1 // pred_fallthru
      _
    // Predicated region
    $region6: #{tpu_custom_call.1} parent=1 // pred_check
      _
    $region7: #{tpu_custom_call.1} parent=1 // pred_check_branch
      %14 = sbr.rel (0) target = $region9
    $region8: #{tpu_custom_call.1} parent=1 // pred_region
      _
    $region9: #{tpu_custom_call.1} parent=1 // pred_fallthru
      _
    // Predicated region
    $region10: #{tpu_custom_call.1} parent=1 // pred_check
      _
    $region11: #{tpu_custom_call.1} parent=1 // pred_check_branch
      %16 = sbr.rel (0) target = $region13
    $region12: #{tpu_custom_call.1} parent=1 // pred_region
      %s18 = ssub.s32 6912, 6912
      %19 = vsyncadd [#allocation3], %s18
      %s20 = sshll.u32 [#allocation2], 4
      %s21 = int_to_ptr.vmem [resolvable:$true] %s20
      %26 = dma.hbm_to_vmem [thread:$0]  %s2, 6912, %s21, [#allocation3], 128, 128, 8
    $region13: #{tpu_custom_call.1} parent=1 // pred_fallthru
      _
    // Predicated region
    $region14: #{tpu_custom_call.1} parent=1 // pred_check
      _
    $region15: #{tpu_custom_call.1} parent=1 // pred_check_branch
      %28 = sbr.rel (0) target = $region17
    $region16: #{tpu_custom_call.1} parent=1 // pred_region
      _
    $region17: #{tpu_custom_call.1} parent=1 // pred_fallthru
      _
    // Predicated region
    $region18: #{tpu_custom_call.1} parent=1 // pred_check
      _
    $region19: #{tpu_custom_call.1} parent=1 // pred_check_branch
      %30 = sbr.rel (0) target = $region21
    $region20: #{tpu_custom_call.1} parent=1 // pred_region
      %31 = dma.done [#allocation3], 6912
    $region21: #{tpu_custom_call.1} parent=1 // pred_fallthru
      _
    %v32 = vld [vmem:[%s0] sm:$0xff]
    %v33 = vld [vmem:[#allocation2] sm:$0xff]
    %v34 = vld [vmem:[#allocation2 + $0x8] sm:$0xff]
    %v35 = vld [vmem:[%s3] sm:$0x1]
    %v36 = vlaneseq
    %v37 = vshrl.u32 %v36, 7
    %v38 = vsub.s32 0, %v37
    %v39 = vrot.slane %v35, %v38
    %vm40 = vcmask 130048
    %v42 = vsel %vm40, %v32, 0
    %44 = vmatprep.subr.mxu0 0.0
    %45 = vmatpush1.msra.mxu0 %v33
    %46 = vmatprep.subr.mxu0 0.0
    %47 = vmatpush1.msra.mxu0 %v34
    %48 = vmatprep.subr.mxu0 0.0
    %49 = vmatpush1.msra.mxu0 0.0
    %50 = vmatprep.subr.mxu0 0.0
    %51 = vmatpush1.msra.mxu0 0.0
    %52 = vmatprep.subr.mxu0 0.0
    %53 = vmatpush1.msra.mxu0 0.0
    %54 = vmatprep.subr.mxu0 0.0
    %55 = vmatpush1.msra.mxu0 0.0
    %56 = vmatprep.subr.mxu0 0.0
    %57 = vmatpush1.msra.mxu0 0.0
    %58 = vmatprep.subr.mxu0 0.0
    %59 = vmatpush1.msra.mxu0 0.0
    %60 = vmatprep.subr.mxu0 0.0
    %61 = vmatpush1.msra.mxu0 0.0
    %62 = vmatprep.subr.mxu0 0.0
    %63 = vmatpush1.msra.mxu0 0.0
    %64 = vmatprep.subr.mxu0 0.0
    %65 = vmatpush1.msra.mxu0 0.0
    %66 = vmatprep.subr.mxu0 0.0
    %67 = vmatpush1.msra.mxu0 0.0
    %68 = vmatprep.subr.mxu0 0.0
    %69 = vmatpush1.msra.mxu0 0.0
    %70 = vmatprep.subr.mxu0 0.0
    %71 = vmatpush1.msra.mxu0 0.0
    %72 = vmatprep.subr.mxu0 0.0
    %73 = vmatpush1.msra.mxu0 0.0
    %74 = vmatprep.subr.mxu0 0.0
    %75 = vmatpush1.msra.mxu0 0.0
    %76 = vmatprep.subr.mxu0 0.0
    %77 = vmatpush1.msra.mxu0 0.0
    %78 = vmatprep.subr.mxu0 0.0
    %79 = vmatpush1.msra.mxu0 0.0
    %80 = vmatprep.subr.mxu0 0.0
    %81 = vmatpush1.msra.mxu0 0.0
    %82 = vmatprep.subr.mxu0 0.0
    %83 = vmatpush1.msra.mxu0 0.0
    %84 = vmatprep.subr.mxu0 0.0
    %85 = vmatpush1.msra.mxu0 0.0
    %86 = vmatprep.subr.mxu0 0.0
    %87 = vmatpush1.msra.mxu0 0.0
    %88 = vmatprep.subr.mxu0 0.0
    %89 = vmatpush1.msra.mxu0 0.0
    %90 = vmatprep.subr.mxu0 0.0
    %91 = vmatpush1.msra.mxu0 0.0
    %92 = vmatprep.subr.mxu0 0.0
    %93 = vmatpush1.msra.mxu0 0.0
    %94 = vmatprep.subr.mxu0 0.0
    %95 = vmatpush1.msra.mxu0 0.0
    %96 = vmatprep.subr.mxu0 0.0
    %97 = vmatpush1.msra.mxu0 0.0
    %98 = vmatprep.subr.mxu0 0.0
    %99 = vmatpush1.msra.mxu0 0.0
    %100 = vmatprep.subr.mxu0 0.0
    %101 = vmatpush1.msra.mxu0 0.0
    %102 = vmatprep.subr.mxu0 0.0
    %103 = vmatpush1.msra.mxu0 0.0
    %104 = vmatprep.subr.mxu0 0.0
    %105 = vmatpush1.msra.mxu0 0.0
    %106 = vmatprep.subr.mxu0 0.0
    %107 = vmatpush1.msra.mxu0 0.0
    %108 = vmatprep.mubr.f32.mxu0 0.0
    %109 = vmatmul.mubr.f32.gmra.mrb[0].mxu0 %v42
    %v110 = vpop.f32.mrb[0].mxu0
    %v111 = vadd.f32 %v39, %v110
    %v112 = vpop.f32.mrb[0].mxu0
    %113 = vdwg.mxu0
    %v114 = vmax.f32 %v111, 0.0
    %v115 = vld [vmem:[#allocation2 + $0x10] sm:$0xff]
    %v116 = vld [vmem:[#allocation2 + $0x18] sm:$0xff]
    %v117 = vld [vmem:[#allocation2 + $0x20] sm:$0xff]
    %v118 = vld [vmem:[#allocation2 + $0x28] sm:$0xff]
    %v119 = vld [vmem:[#allocation2 + $0x30] sm:$0xff]
    %v120 = vld [vmem:[#allocation2 + $0x38] sm:$0xff]
    %v121 = vld [vmem:[#allocation2 + $0x40] sm:$0xff]
    %v122 = vld [vmem:[#allocation2 + $0x48] sm:$0xff]
    %v123 = vld [vmem:[#allocation2 + $0x50] sm:$0xff]
    %v124 = vld [vmem:[#allocation2 + $0x58] sm:$0xff]
    %v125 = vld [vmem:[#allocation2 + $0x60] sm:$0xff]
    %v126 = vld [vmem:[#allocation2 + $0x68] sm:$0xff]
    %v127 = vld [vmem:[#allocation2 + $0x70] sm:$0xff]
    %v128 = vld [vmem:[#allocation2 + $0x78] sm:$0xff]
    %v129 = vld [vmem:[#allocation2 + $0x80] sm:$0xff]
    %v130 = vld [vmem:[#allocation2 + $0x88] sm:$0xff]
    %v131 = vld [vmem:[%s3 + $0x1] sm:$0x1]
    %v132 = vlaneseq
    %v133 = vshrl.u32 %v132, 7
    %v134 = vsub.s32 0, %v133
    %v135 = vrot.slane %v131, %v134
    %136 = vmatprep.subr.mxu0 0.0
    %137 = vmatpush1.msra.mxu0 %v115
    %138 = vmatprep.subr.mxu0 0.0
    %139 = vmatpush1.msra.mxu0 %v116
    %140 = vmatprep.subr.mxu0 0.0
    %141 = vmatpush1.msra.mxu0 %v117
    %142 = vmatprep.subr.mxu0 0.0
    %143 = vmatpush1.msra.mxu0 %v118
    %144 = vmatprep.subr.mxu0 0.0
    %145 = vmatpush1.msra.mxu0 %v119
    %146 = vmatprep.subr.mxu0 0.0
    %147 = vmatpush1.msra.mxu0 %v120
    %148 = vmatprep.subr.mxu0 0.0
    %149 = vmatpush1.msra.mxu0 %v121
    %150 = vmatprep.subr.mxu0 0.0
    %151 = vmatpush1.msra.mxu0 %v122
    %152 = vmatprep.subr.mxu0 0.0
    %153 = vmatpush1.msra.mxu0 %v123
    %154 = vmatprep.subr.mxu0 0.0
    %155 = vmatpush1.msra.mxu0 %v124
    %156 = vmatprep.subr.mxu0 0.0
    %157 = vmatpush1.msra.mxu0 %v125
    %158 = vmatprep.subr.mxu0 0.0
    %159 = vmatpush1.msra.mxu0 %v126
    %160 = vmatprep.subr.mxu0 0.0
    %161 = vmatpush1.msra.mxu0 %v127
    %162 = vmatprep.subr.mxu0 0.0
    %163 = vmatpush1.msra.mxu0 %v128
    %164 = vmatprep.subr.mxu0 0.0
    %165 = vmatpush1.msra.mxu0 %v129
    %166 = vmatprep.subr.mxu0 0.0
    %167 = vmatpush1.msra.mxu0 %v130
    %168 = vmatprep.subr.mxu0 0.0
    %169 = vmatpush1.msra.mxu0 0.0
    %170 = vmatprep.subr.mxu0 0.0
    %171 = vmatpush1.msra.mxu0 0.0
    %172 = vmatprep.subr.mxu0 0.0
    %173 = vmatpush1.msra.mxu0 0.0
    %174 = vmatprep.subr.mxu0 0.0
    %175 = vmatpush1.msra.mxu0 0.0
    %176 = vmatprep.subr.mxu0 0.0
    %177 = vmatpush1.msra.mxu0 0.0
    %178 = vmatprep.subr.mxu0 0.0
    %179 = vmatpush1.msra.mxu0 0.0
    %180 = vmatprep.subr.mxu0 0.0
    %181 = vmatpush1.msra.mxu0 0.0
    %182 = vmatprep.subr.mxu0 0.0
    %183 = vmatpush1.msra.mxu0 0.0
    %184 = vmatprep.subr.mxu0 0.0
    %185 = vmatpush1.msra.mxu0 0.0
    %186 = vmatprep.subr.mxu0 0.0
    %187 = vmatpush1.msra.mxu0 0.0
    %188 = vmatprep.subr.mxu0 0.0
    %189 = vmatpush1.msra.mxu0 0.0
    %190 = vmatprep.subr.mxu0 0.0
    %191 = vmatpush1.msra.mxu0 0.0
    %192 = vmatprep.subr.mxu0 0.0
    %193 = vmatpush1.msra.mxu0 0.0
    %194 = vmatprep.subr.mxu0 0.0
    %195 = vmatpush1.msra.mxu0 0.0
    %196 = vmatprep.subr.mxu0 0.0
    %197 = vmatpush1.msra.mxu0 0.0
    %198 = vmatprep.subr.mxu0 0.0
    %199 = vmatpush1.msra.mxu0 0.0
    %200 = vmatprep.mubr.f32.mxu0 0.0
    %201 = vmatmul.mubr.f32.gmra.mrb[0].mxu0 %v114
    %v202 = vpop.f32.mrb[0].mxu0
    %v203 = vadd.f32 %v135, %v202
    %v204 = vpop.f32.mrb[0].mxu0
    %205 = vdwg.mxu0
    %v206 = vmax.f32 %v203, 0.0
    %v207 = vld [vmem:[%s1] sm:$0xff]
    %209 = vset.pattern.permute.xlu0 0
    %210 = vperm.xlu0 %209, %v207
    %v211 = vpop.permute.xlu0 %210
    %v213 = vmul.f32 %v206, %v211
    %214 = vset.pattern.permute.xlu0 1
    %215 = vperm.xlu0 %214, %v207
    %v216 = vpop.permute.xlu0 %215
    %v218 = vmul.f32 %v206, %v216
    %220 = vrot.lane.b32.xlu0 %v218, 96
    %v221 = vpop.permute.xlu0 %220
    %v223 = vadd.f32 %v213, %v221
    %v224 = vld [vmem:[#allocation2 + $0x90] sm:$0xff]
    %v225 = vld [vmem:[#allocation2 + $0x98] sm:$0xff]
    %v226 = vld [vmem:[#allocation2 + $0xa0] sm:$0xff]
    %v227 = vld [vmem:[#allocation2 + $0xa8] sm:$0xff]
    %v228 = vld [vmem:[%s3 + $0x2] sm:$0x1]
    %v229 = vlaneseq
    %v230 = vshrl.u32 %v229, 7
    %v231 = vsub.s32 0, %v230
    %v232 = vrot.slane %v228, %v231
    %vm233 = vcmask 261120
    %v235 = vsel %vm233, %v223, 0
    %237 = vmatprep.subr.mxu0 0.0
    %238 = vmatpush1.msra.mxu0 %v224
    %239 = vmatprep.subr.mxu0 0.0
    %240 = vmatpush1.msra.mxu0 %v225
    %241 = vmatprep.subr.mxu0 0.0
    %242 = vmatpush1.msra.mxu0 %v226
    %243 = vmatprep.subr.mxu0 0.0
    %244 = vmatpush1.msra.mxu0 %v227
    %245 = vmatprep.subr.mxu0 0.0
    %246 = vmatpush1.msra.mxu0 0.0
    %247 = vmatprep.subr.mxu0 0.0
    %248 = vmatpush1.msra.mxu0 0.0
    %249 = vmatprep.subr.mxu0 0.0
    %250 = vmatpush1.msra.mxu0 0.0
    %251 = vmatprep.subr.mxu0 0.0
    %252 = vmatpush1.msra.mxu0 0.0
    %253 = vmatprep.subr.mxu0 0.0
    %254 = vmatpush1.msra.mxu0 0.0
    %255 = vmatprep.subr.mxu0 0.0
    %256 = vmatpush1.msra.mxu0 0.0
    %257 = vmatprep.subr.mxu0 0.0
    %258 = vmatpush1.msra.mxu0 0.0
    %259 = vmatprep.subr.mxu0 0.0
    %260 = vmatpush1.msra.mxu0 0.0
    %261 = vmatprep.subr.mxu0 0.0
    %262 = vmatpush1.msra.mxu0 0.0
    %263 = vmatprep.subr.mxu0 0.0
    %264 = vmatpush1.msra.mxu0 0.0
    %265 = vmatprep.subr.mxu0 0.0
    %266 = vmatpush1.msra.mxu0 0.0
    %267 = vmatprep.subr.mxu0 0.0
    %268 = vmatpush1.msra.mxu0 0.0
    %269 = vmatprep.subr.mxu0 0.0
    %270 = vmatpush1.msra.mxu0 0.0
    %271 = vmatprep.subr.mxu0 0.0
    %272 = vmatpush1.msra.mxu0 0.0
    %273 = vmatprep.subr.mxu0 0.0
    %274 = vmatpush1.msra.mxu0 0.0
    %275 = vmatprep.subr.mxu0 0.0
    %276 = vmatpush1.msra.mxu0 0.0
    %277 = vmatprep.subr.mxu0 0.0
    %278 = vmatpush1.msra.mxu0 0.0
    %279 = vmatprep.subr.mxu0 0.0
    %280 = vmatpush1.msra.mxu0 0.0
    %281 = vmatprep.subr.mxu0 0.0
    %282 = vmatpush1.msra.mxu0 0.0
    %283 = vmatprep.subr.mxu0 0.0
    %284 = vmatpush1.msra.mxu0 0.0
    %285 = vmatprep.subr.mxu0 0.0
    %286 = vmatpush1.msra.mxu0 0.0
    %287 = vmatprep.subr.mxu0 0.0
    %288 = vmatpush1.msra.mxu0 0.0
    %289 = vmatprep.subr.mxu0 0.0
    %290 = vmatpush1.msra.mxu0 0.0
    %291 = vmatprep.subr.mxu0 0.0
    %292 = vmatpush1.msra.mxu0 0.0
    %293 = vmatprep.subr.mxu0 0.0
    %294 = vmatpush1.msra.mxu0 0.0
    %295 = vmatprep.subr.mxu0 0.0
    %296 = vmatpush1.msra.mxu0 0.0
    %297 = vmatprep.subr.mxu0 0.0
    %298 = vmatpush1.msra.mxu0 0.0
    %299 = vmatprep.subr.mxu0 0.0
    %300 = vmatpush1.msra.mxu0 0.0
    %301 = vmatprep.mubr.f32.mxu0 0.0
    %302 = vmatmul.mubr.f32.gmra.mrb[0].mxu0 %v235
    %v303 = vpop.f32.mrb[0].mxu0
    %v304 = vadd.f32 %v232, %v303
    %v305 = vpop.f32.mrb[0].mxu0
    %306 = vdwg.mxu0
    %v307 = vmax.f32 %v304, 0.0
    %v308 = vld [vmem:[#allocation2 + $0xb0] sm:$0xff]
    %v309 = vld [vmem:[#allocation2 + $0xb8] sm:$0xff]
    %v310 = vld [vmem:[#allocation2 + $0xc0] sm:$0xff]
    %v311 = vld [vmem:[#allocation2 + $0xc8] sm:$0xff]
    %v312 = vld [vmem:[#allocation2 + $0xd0] sm:$0xff]
    %v313 = vld [vmem:[#allocation2 + $0xd8] sm:$0xff]
    %v314 = vld [vmem:[#allocation2 + $0xe0] sm:$0xff]
    %v315 = vld [vmem:[#allocation2 + $0xe8] sm:$0xff]
    %v316 = vld [vmem:[#allocation2 + $0xf0] sm:$0xff]
    %v317 = vld [vmem:[#allocation2 + $0xf8] sm:$0xff]
    %v318 = vld [vmem:[#allocation2 + $0x100] sm:$0xff]
    %v319 = vld [vmem:[#allocation2 + $0x108] sm:$0xff]
    %v320 = vld [vmem:[#allocation2 + $0x110] sm:$0xff]
    %v321 = vld [vmem:[#allocation2 + $0x118] sm:$0xff]
    %v322 = vld [vmem:[#allocation2 + $0x120] sm:$0xff]
    %v323 = vld [vmem:[#allocation2 + $0x128] sm:$0xff]
    %v324 = vld [vmem:[%s3 + $0x3] sm:$0x1]
    %v325 = vlaneseq
    %v326 = vshrl.u32 %v325, 7
    %v327 = vsub.s32 0, %v326
    %v328 = vrot.slane %v324, %v327
    %329 = vmatprep.subr.mxu0 0.0
    %330 = vmatpush1.msra.mxu0 %v308
    %331 = vmatprep.subr.mxu0 0.0
    %332 = vmatpush1.msra.mxu0 %v309
    %333 = vmatprep.subr.mxu0 0.0
    %334 = vmatpush1.msra.mxu0 %v310
    %335 = vmatprep.subr.mxu0 0.0
    %336 = vmatpush1.msra.mxu0 %v311
    %337 = vmatprep.subr.mxu0 0.0
    %338 = vmatpush1.msra.mxu0 %v312
    %339 = vmatprep.subr.mxu0 0.0
    %340 = vmatpush1.msra.mxu0 %v313
    %341 = vmatprep.subr.mxu0 0.0
    %342 = vmatpush1.msra.mxu0 %v314
    %343 = vmatprep.subr.mxu0 0.0
    %344 = vmatpush1.msra.mxu0 %v315
    %345 = vmatprep.subr.mxu0 0.0
    %346 = vmatpush1.msra.mxu0 %v316
    %347 = vmatprep.subr.mxu0 0.0
    %348 = vmatpush1.msra.mxu0 %v317
    %349 = vmatprep.subr.mxu0 0.0
    %350 = vmatpush1.msra.mxu0 %v318
    %351 = vmatprep.subr.mxu0 0.0
    %352 = vmatpush1.msra.mxu0 %v319
    %353 = vmatprep.subr.mxu0 0.0
    %354 = vmatpush1.msra.mxu0 %v320
    %355 = vmatprep.subr.mxu0 0.0
    %356 = vmatpush1.msra.mxu0 %v321
    %357 = vmatprep.subr.mxu0 0.0
    %358 = vmatpush1.msra.mxu0 %v322
    %359 = vmatprep.subr.mxu0 0.0
    %360 = vmatpush1.msra.mxu0 %v323
    %361 = vmatprep.subr.mxu0 0.0
    %362 = vmatpush1.msra.mxu0 0.0
    %363 = vmatprep.subr.mxu0 0.0
    %364 = vmatpush1.msra.mxu0 0.0
    %365 = vmatprep.subr.mxu0 0.0
    %366 = vmatpush1.msra.mxu0 0.0
    %367 = vmatprep.subr.mxu0 0.0
    %368 = vmatpush1.msra.mxu0 0.0
    %369 = vmatprep.subr.mxu0 0.0
    %370 = vmatpush1.msra.mxu0 0.0
    %371 = vmatprep.subr.mxu0 0.0
    %372 = vmatpush1.msra.mxu0 0.0
    %373 = vmatprep.subr.mxu0 0.0
    %374 = vmatpush1.msra.mxu0 0.0
    %375 = vmatprep.subr.mxu0 0.0
    %376 = vmatpush1.msra.mxu0 0.0
    %377 = vmatprep.subr.mxu0 0.0
    %378 = vmatpush1.msra.mxu0 0.0
    %379 = vmatprep.subr.mxu0 0.0
    %380 = vmatpush1.msra.mxu0 0.0
    %381 = vmatprep.subr.mxu0 0.0
    %382 = vmatpush1.msra.mxu0 0.0
    %383 = vmatprep.subr.mxu0 0.0
    %384 = vmatpush1.msra.mxu0 0.0
    %385 = vmatprep.subr.mxu0 0.0
    %386 = vmatpush1.msra.mxu0 0.0
    %387 = vmatprep.subr.mxu0 0.0
    %388 = vmatpush1.msra.mxu0 0.0
    %389 = vmatprep.subr.mxu0 0.0
    %390 = vmatpush1.msra.mxu0 0.0
    %391 = vmatprep.subr.mxu0 0.0
    %392 = vmatpush1.msra.mxu0 0.0
    %393 = vmatprep.mubr.f32.mxu0 0.0
    %394 = vmatmul.mubr.f32.gmra.mrb[0].mxu0 %v307
    %v395 = vpop.f32.mrb[0].mxu0
    %v396 = vadd.f32 %v328, %v395
    %v397 = vpop.f32.mrb[0].mxu0
    %398 = vdwg.mxu0
    %v399 = vmax.f32 %v396, 0.0
    %v400 = vld [vmem:[#allocation2 + $0x130] sm:$0xff]
    %v401 = vld [vmem:[#allocation2 + $0x138] sm:$0xff]
    %v402 = vld [vmem:[#allocation2 + $0x140] sm:$0xff]
    %v403 = vld [vmem:[#allocation2 + $0x148] sm:$0xff]
    %v404 = vld [vmem:[#allocation2 + $0x150] sm:$0xff]
    %v405 = vld [vmem:[#allocation2 + $0x158] sm:$0xff]
    %v406 = vld [vmem:[#allocation2 + $0x160] sm:$0xff]
    %v407 = vld [vmem:[#allocation2 + $0x168] sm:$0xff]
    %v408 = vld [vmem:[#allocation2 + $0x170] sm:$0xff]
    %v409 = vld [vmem:[#allocation2 + $0x178] sm:$0xff]
    %v410 = vld [vmem:[#allocation2 + $0x180] sm:$0xff]
    %v411 = vld [vmem:[#allocation2 + $0x188] sm:$0xff]
    %v412 = vld [vmem:[#allocation2 + $0x190] sm:$0xff]
    %v413 = vld [vmem:[#allocation2 + $0x198] sm:$0xff]
    %v414 = vld [vmem:[#allocation2 + $0x1a0] sm:$0xff]
    %v415 = vld [vmem:[#allocation2 + $0x1a8] sm:$0xff]
    %v416 = vld [vmem:[%s3 + $0x4] sm:$0x1]
    %v417 = vlaneseq
    %v418 = vshrl.u32 %v417, 7
    %v419 = vsub.s32 0, %v418
    %v420 = vrot.slane %v416, %v419
    %421 = vmatprep.subr.mxu0 0.0
    %422 = vmatpush1.msra.mxu0 %v400
    %423 = vmatprep.subr.mxu0 0.0
    %424 = vmatpush1.msra.mxu0 %v401
    %425 = vmatprep.subr.mxu0 0.0
    %426 = vmatpush1.msra.mxu0 %v402
    %427 = vmatprep.subr.mxu0 0.0
    %428 = vmatpush1.msra.mxu0 %v403
    %429 = vmatprep.subr.mxu0 0.0
    %430 = vmatpush1.msra.mxu0 %v404
    %431 = vmatprep.subr.mxu0 0.0
    %432 = vmatpush1.msra.mxu0 %v405
    %433 = vmatprep.subr.mxu0 0.0
    %434 = vmatpush1.msra.mxu0 %v406
    %435 = vmatprep.subr.mxu0 0.0
    %436 = vmatpush1.msra.mxu0 %v407
    %437 = vmatprep.subr.mxu0 0.0
    %438 = vmatpush1.msra.mxu0 %v408
    %439 = vmatprep.subr.mxu0 0.0
    %440 = vmatpush1.msra.mxu0 %v409
    %441 = vmatprep.subr.mxu0 0.0
    %442 = vmatpush1.msra.mxu0 %v410
    %443 = vmatprep.subr.mxu0 0.0
    %444 = vmatpush1.msra.mxu0 %v411
    %445 = vmatprep.subr.mxu0 0.0
    %446 = vmatpush1.msra.mxu0 %v412
    %447 = vmatprep.subr.mxu0 0.0
    %448 = vmatpush1.msra.mxu0 %v413
    %449 = vmatprep.subr.mxu0 0.0
    %450 = vmatpush1.msra.mxu0 %v414
    %451 = vmatprep.subr.mxu0 0.0
    %452 = vmatpush1.msra.mxu0 %v415
    %453 = vmatprep.subr.mxu0 0.0
    %454 = vmatpush1.msra.mxu0 0.0
    %455 = vmatprep.subr.mxu0 0.0
    %456 = vmatpush1.msra.mxu0 0.0
    %457 = vmatprep.subr.mxu0 0.0
    %458 = vmatpush1.msra.mxu0 0.0
    %459 = vmatprep.subr.mxu0 0.0
    %460 = vmatpush1.msra.mxu0 0.0
    %461 = vmatprep.subr.mxu0 0.0
    %462 = vmatpush1.msra.mxu0 0.0
    %463 = vmatprep.subr.mxu0 0.0
    %464 = vmatpush1.msra.mxu0 0.0
    %465 = vmatprep.subr.mxu0 0.0
    %466 = vmatpush1.msra.mxu0 0.0
    %467 = vmatprep.subr.mxu0 0.0
    %468 = vmatpush1.msra.mxu0 0.0
    %469 = vmatprep.subr.mxu0 0.0
    %470 = vmatpush1.msra.mxu0 0.0
    %471 = vmatprep.subr.mxu0 0.0
    %472 = vmatpush1.msra.mxu0 0.0
    %473 = vmatprep.subr.mxu0 0.0
    %474 = vmatpush1.msra.mxu0 0.0
    %475 = vmatprep.subr.mxu0 0.0
    %476 = vmatpush1.msra.mxu0 0.0
    %477 = vmatprep.subr.mxu0 0.0
    %478 = vmatpush1.msra.mxu0 0.0
    %479 = vmatprep.subr.mxu0 0.0
    %480 = vmatpush1.msra.mxu0 0.0
    %481 = vmatprep.subr.mxu0 0.0
    %482 = vmatpush1.msra.mxu0 0.0
    %483 = vmatprep.subr.mxu0 0.0
    %484 = vmatpush1.msra.mxu0 0.0
    %485 = vmatprep.mubr.f32.mxu0 0.0
    %486 = vmatmul.mubr.f32.gmra.mrb[0].mxu0 %v399
    %v487 = vpop.f32.mrb[0].mxu0
    %v488 = vadd.f32 %v420, %v487
    %v489 = vpop.f32.mrb[0].mxu0
    %490 = vdwg.mxu0
    %491 = vst [vmem:[#allocation5] sm:$0xff] %v488
    // Predicated region
    $region22: #{tpu_custom_call.1} parent=1 // pred_check
      _
    $region23: #{tpu_custom_call.1} parent=1 // pred_check_branch
      %493 = sbr.rel (0) target = $region25
    $region24: #{tpu_custom_call.1} parent=1 // pred_region
      %s495 = ssub.s32 128, 128
      %496 = vsyncadd [#allocation4], %s495
      %s498 = sshll.u32 [#allocation5], 4
      %s499 = int_to_ptr.vmem [resolvable:$true] %s498
      %501 = dma.vmem_to_hbm [thread:$0]  %s499, 128, %s4, [#allocation4]
    $region25: #{tpu_custom_call.1} parent=1 // pred_fallthru
      _
    // Predicated region
    $region26: #{tpu_custom_call.1} parent=1 // pred_check
      _
    $region27: #{tpu_custom_call.1} parent=1 // pred_check_branch
      %503 = sbr.rel (0) target = $region29
    $region28: #{tpu_custom_call.1} parent=1 // pred_region
      %504 = dma.done [#allocation4], 128
    $region29: #{tpu_custom_call.1} parent=1 // pred_fallthru
      _
    %505 = vsyncpa [#allocation3], 1
    %506 = vsyncpa [#allocation4], 1

</llo_original>
